<compile_context>
chip_gen: v7x
topology: tpu7x:2x2x1
jax: 0.10.0
libtpu: 0.0.40
codegen_flags: <defaults>
</compile_context>

<pallas_src>
import functools
import math

import jax
import jax.numpy as jnp
from jax.experimental import pallas as pl
from jax.experimental.pallas import tpu as pltpu

_TWO_PI = 2.0 * math.pi
_HALF_PI = 0.5 * math.pi


def _gfp_kernel(x_ref, w_ref, b_ref, o_ref, *, log: bool):
    # x_ref: (TB, 1), w_ref: (1, 2E) = 2*pi*[w, w], b_ref: (1, 2E) phase bias,
    # o_ref: (TB, 2E).
    x = x_ref[...]
    if log:
        x = jnp.log(x)
    # Broadcast outer product on the VPU; single sin pass over the full
    # lane-dense (TB, 2E) tile:
    #   lanes [0:E)  -> sin(2*pi*log(x)*w)            (bias 0)
    #   lanes [E:2E) -> sin(2*pi*log(x)*w + pi/2) = cos(2*pi*log(x)*w)
    # (halves pre-swapped in the bias row when flip_sin_to_cos=True).
    phase = x * w_ref[...] + b_ref[...]
    o_ref[...] = jnp.sin(phase).astype(o_ref.dtype)


def _round_up(v: int, m: int) -> int:
    return (v + m - 1) // m * m


def _choose_tb(B: int, E: int, out_itemsize: int,
               budget_bytes: int = 8 << 20) -> int:
    """Pick a batch tile (multiple of 8) under a VMEM byte budget.

    Per-row footprint in the tiled path:
      * double-buffered output block:      2 * (2E * out_itemsize)
      * double-buffered lane-padded x col: 2 * (128 * 4)   (a (tb,1) f32 block
        is padded to 128 lanes in VMEM — 128x its raw size).
    Aims for >= 2 roughly balanced tiles so v7x's two TensorCores both work.
    """
    row_bytes = 2 * (2 * E * out_itemsize) + 2 * (128 * 4)
    tb_cap = max(8, (budget_bytes // row_bytes) // 8 * 8)
    n_tiles = max(2, -(-B // tb_cap))
    tb = _round_up(-(-B // n_tiles), 8)
    while tb > tb_cap and tb > 8:
        n_tiles += 1
        tb = _round_up(-(-B // n_tiles), 8)
    return tb


def gaussian_fourier_projection(x, weight, *, log: bool = True,
                                flip_sin_to_cos: bool = False,
                                out_dtype=jnp.float32,
                                block_b=None,
                                small_path_max_bytes: int = 2 << 20):
    """x: (B,) float, weight: (E,) float -> (B, 2E) `out_dtype`.

    out_dtype=jnp.bfloat16 halves HBM writeback (recommended on v5e for large
    B); the log/multiply/sin math is always done in f32.
    block_b overrides the automatic VMEM-budgeted batch tile (testing/tuning).
    """
    B = x.shape[0]
    E = weight.shape[0]
    out_itemsize = jnp.dtype(out_dtype).itemsize

    x2 = x.reshape(B, 1).astype(jnp.float32)

    # One-time constant prep on the frozen parameter (constant-folds under
    # jit): pre-double the weight row with the 2*pi scale folded in, and build
    # the pi/2 phase-bias row that turns the cos half into a sin.
    w32 = weight.astype(jnp.float32) * jnp.float32(_TWO_PI)
    w_ext = jnp.concatenate([w32, w32]).reshape(1, 2 * E)
    zeros = jnp.zeros((E,), jnp.float32)
    halfpi = jnp.full((E,), _HALF_PI, dtype=jnp.float32)
    if flip_sin_to_cos:
        bias = jnp.concatenate([halfpi, zeros]).reshape(1, 2 * E)
    else:
        bias = jnp.concatenate([zeros, halfpi]).reshape(1, 2 * E)

    kernel = functools.partial(_gfp_kernel, log=log)

    cost = pl.CostEstimate(
        flops=2 * B * 2 * E,                       # mul + add per output elem
        transcendentals=B * 2 * E + B,             # sin per elem + log per row
        bytes_accessed=B * 4 + 2 * (2 * E) * 4 + B * 2 * E * out_itemsize,
    )
    out_shape = jax.ShapeDtypeStruct((B, 2 * E), out_dtype)

    # Route on bytes, not rows: output + lane-padded x column, all resident.
    small_bytes = B * 2 * E * out_itemsize + _round_up(B, 8) * 128 * 4
    if block_b is None and small_bytes <= small_path_max_bytes:
        # Small path: one resident VMEM block, no grid, no pipeline machinery.
        return pl.pallas_call(
            kernel,
            out_shape=out_shape,
            in_specs=[pl.BlockSpec(memory_space=pltpu.MemorySpace.VMEM),
                      pl.BlockSpec(memory_space=pltpu.MemorySpace.VMEM),
                      pl.BlockSpec(memory_space=pltpu.MemorySpace.VMEM)],
            out_specs=pl.BlockSpec(memory_space=pltpu.MemorySpace.VMEM),
            cost_estimate=cost,
        )(x2, w_ext, bias)

    # Tiled path: grid over the batch; each step is a (tb, 2E) lane-dense
    # output block. w_ext/bias keep a constant block index so they stay
    # resident in VMEM across the grid (not re-DMA'd per step).
    if block_b is None:
        tb = _choose_tb(B, E, out_itemsize)
    else:
        tb = _round_up(int(block_b), 8)  # (8,128) rule: sublane dim % 8 == 0
    tb = min(tb, _round_up(B, 8))
    grid = (pl.cdiv(B, tb),)
    # Note: when B % tb != 0, padded rows of the last partial x block feed
    # jnp.log (garbage values) before being discarded by the masked output
    # writeback — harmless on TPU.
    return pl.pallas_call(
        kernel,
        out_shape=out_shape,
        grid=grid,
        in_specs=[pl.BlockSpec((tb, 1), lambda i: (i, 0)),
                  pl.BlockSpec((1, 2 * E), lambda i: (0, 0)),
                  pl.BlockSpec((1, 2 * E), lambda i: (0, 0))],
        out_specs=pl.BlockSpec((tb, 2 * E), lambda i: (i, 0)),
        compiler_params=pltpu.CompilerParams(
            dimension_semantics=("parallel",)),
        cost_estimate=cost,
    )(x2, w_ext, bias)


def _reference(x, weight, *, log=True, flip_sin_to_cos=False):
    if log:
        x = jnp.log(x)
    x_proj = x[:, None] * weight[None, :] * 2.0 * jnp.pi
    if flip_sin_to_cos:
        return jnp.concatenate([jnp.cos(x_proj), jnp.sin(x_proj)], axis=-1)
    return jnp.concatenate([jnp.sin(x_proj), jnp.cos(x_proj)], axis=-1)


if __name__ == "__main__":
    key = jax.random.PRNGKey(0)
    k_w, k_x1, k_x2 = jax.random.split(key, 3)

    embedding_size = 128   # small variant of the default 256
    scale = 1.0

    # Fixed "parameter": weight = randn(E) * scale (frozen, no grad).
    weight = jax.random.normal(k_w, (embedding_size,), dtype=jnp.float32) * scale

    # --- small-batch path (no grid, resident VMEM block) ---
    batch = 8
    x_small = jax.random.uniform(k_x1, (batch,), dtype=jnp.float32,
                                 minval=0.01, maxval=10.0)
    out_small = gaussian_fourier_projection(x_small, weight,
                                            log=True, flip_sin_to_cos=False)
    out_small = jax.block_until_ready(out_small)
    ref_small = _reference(x_small, weight, log=True, flip_sin_to_cos=False)
    assert out_small.shape == (batch, 2 * embedding_size), out_small.shape
    assert jnp.allclose(out_small, ref_small, atol=1e-4, rtol=1e-4), \
        "small-path mismatch vs reference"

    # --- B-tiled path (small block_b forces the grid; also tests flip) ---
    batch_big = 64
    x_big = jax.random.uniform(k_x2, (batch_big,), dtype=jnp.float32,
                               minval=0.01, maxval=10.0)
    out_big = gaussian_fourier_projection(x_big, weight, log=True,
                                          flip_sin_to_cos=True, block_b=16)
    out_big = jax.block_until_ready(out_big)
    ref_big = _reference(x_big, weight, log=True, flip_sin_to_cos=True)
    assert out_big.shape == (batch_big, 2 * embedding_size), out_big.shape
    assert jnp.allclose(out_big, ref_big, atol=1e-4, rtol=1e-4), \
        "tiled-path mismatch vs reference"

    # --- bf16 output path (math in f32, cast at store) ---
    out_bf16 = gaussian_fourier_projection(x_big, weight, log=True,
                                           flip_sin_to_cos=False,
                                           out_dtype=jnp.bfloat16, block_b=16)
    out_bf16 = jax.block_until_ready(out_bf16)
    ref_b = _reference(x_big, weight, log=True, flip_sin_to_cos=False)
    assert out_bf16.dtype == jnp.bfloat16
    assert jnp.allclose(out_bf16.astype(jnp.float32), ref_b,
                        atol=1e-2, rtol=1e-2), "bf16-path mismatch vs reference"

    print("KERNEL_OK")
</pallas_src>

<mosaic_0001>
module attributes {stable_mosaic.version = 11 : i64} {
  func.func @_gfp_kernel(%arg0: memref<8x1xf32, #tpu.memory_space<vmem>>, %arg1: memref<1x256xf32, #tpu.memory_space<vmem>>, %arg2: memref<1x256xf32, #tpu.memory_space<vmem>>, %arg3: memref<8x256xf32, #tpu.memory_space<vmem>>) attributes {dimension_semantics = [], scalar_prefetch = 0 : i64, scratch_operands = 0 : i64, tpu.core_type = #tpu.core_type<tc>} {
    %c0 = arith.constant 0 : index
    %c0_0 = arith.constant 0 : index
    %0 = vector.load %arg0[%c0, %c0_0] : memref<8x1xf32, #tpu.memory_space<vmem>>, vector<8x1xf32>
    %1 = math.log %0 : vector<8x1xf32>
    %c0_1 = arith.constant 0 : index
    %c0_2 = arith.constant 0 : index
    %2 = vector.load %arg1[%c0_1, %c0_2] : memref<1x256xf32, #tpu.memory_space<vmem>>, vector<1x256xf32>
    %3 = vector.broadcast %1 : vector<8x1xf32> to vector<8x256xf32>
    %4 = vector.broadcast %2 : vector<1x256xf32> to vector<8x256xf32>
    %5 = arith.mulf %3, %4 : vector<8x256xf32>
    %c0_3 = arith.constant 0 : index
    %c0_4 = arith.constant 0 : index
    %6 = vector.load %arg2[%c0_3, %c0_4] : memref<1x256xf32, #tpu.memory_space<vmem>>, vector<1x256xf32>
    %7 = vector.broadcast %6 : vector<1x256xf32> to vector<8x256xf32>
    %8 = arith.addf %5, %7 : vector<8x256xf32>
    %9 = math.sin %8 : vector<8x256xf32>
    %c0_5 = arith.constant 0 : index
    %c0_6 = arith.constant 0 : index
    %10 = vector.load %arg3[%c0_5, %c0_6] : memref<8x256xf32, #tpu.memory_space<vmem>>, vector<8x256xf32>
    tpu.vector_store %arg3[%c0_5, %c0_6], %9 {strides = array<i32>} : memref<8x256xf32, #tpu.memory_space<vmem>>, vector<8x256xf32>,
    return
  }
}

</mosaic_0001>

<llo_original>
// kernel: tpu_custom_call.1
$region0: #{tpu_custom_call.1}
  #allocation0 [shape = 'u32[]', space=smem, size = 0x4, offset = 0x4, fixed_abs, tag = 'smem constant byte address 0x4 - core index']
  #allocation1 [shape = 'u32[144,128]{1,0:T(1,128)}', space=vmem, size = 0x12000, scoped, tag = 'internal scratch']
  %s0 = inlined_call_operand.vmem [shape: f32[8,1], index: 0, kind: input, shape index: {}]
  %s1 = inlined_call_operand.vmem [shape: f32[1,256], index: 1, kind: input, shape index: {}]
  %s2 = inlined_call_operand.vmem [shape: f32[1,256], index: 2, kind: input, shape index: {}]
  %s3 = inlined_call_operand.hbm [shape: f32[8,256], index: 3, kind: output, shape index: {}]
  %s4 = sld [smem:[#allocation0]]
  $region22: #{tpu_custom_call.1} parent=0
    _
  %s6 = ssub.s32 1, %s4
  %s7 = scalar_select 0, %s6, %s4
  $region1: #{tpu_custom_call.1} parent=0
    #allocation2 [shape = 'u8[8192]{0}', space=vmem, size = 0x2000, scoped, tag = 'output window, operand 0, single buffered']
    #allocation3 [shape = 's32[1]{0}', space=sflag, size = 0x4, scoped, tag = 'scoped memory for tpu_custom_call.1']
    %8 = vsyncpa [#allocation3], 0
    // Predicated region
    $region2: #{tpu_custom_call.1} parent=1 // pred_check
      _
    $region3: #{tpu_custom_call.1} parent=1 // pred_check_branch
      %10 = sbr.rel (0) target = $region5
    $region4: #{tpu_custom_call.1} parent=1 // pred_region
      _
    $region5: #{tpu_custom_call.1} parent=1 // pred_fallthru
      _
    // Predicated region
    $region6: #{tpu_custom_call.1} parent=1 // pred_check
      _
    $region7: #{tpu_custom_call.1} parent=1 // pred_check_branch
      %12 = sbr.rel (0) target = $region9
    $region8: #{tpu_custom_call.1} parent=1 // pred_region
      _
    $region9: #{tpu_custom_call.1} parent=1 // pred_fallthru
      _
    // Predicated region
    $region10: #{tpu_custom_call.1} parent=1 // pred_check
      _
    $region11: #{tpu_custom_call.1} parent=1 // pred_check_branch
      %14 = sbr.rel (0) target = $region13
    $region12: #{tpu_custom_call.1} parent=1 // pred_region
      _
    $region13: #{tpu_custom_call.1} parent=1 // pred_fallthru
      _
    %v15 = vld [vmem:[%s0] sm:$0xff]
    %v16 = vlog2.pop %v15
    %v17 = vmul.f32 %v16, 0.6931472
    %v18 = vld [vmem:[%s1] sm:$0x3]
    %20 = vset.pattern.permute.xlu0 0
    %21 = vperm.xlu0 %20, %v17
    %v22 = vpop.permute.xlu0 %21
    %v25 = vlaneseq
    %v26 = vshrl.u32 %v25, 7
    %v27 = vsub.s32 0, %v26
    %v28 = vrot.slane %v18, %v27
    %v29 = vlaneseq
    %v30 = vshrl.u32 %v29, 7
    %v31 = vsub.s32 1, %v30
    %v32 = vrot.slane %v18, %v31
    %v35 = vmul.f32 %v22, %v28
    %v36 = vmul.f32 %v22, %v32
    %v37 = vld [vmem:[%s2] sm:$0x3]
    %v39 = vlaneseq
    %v40 = vshrl.u32 %v39, 7
    %v41 = vsub.s32 0, %v40
    %v42 = vrot.slane %v37, %v41
    %v43 = vlaneseq
    %v44 = vshrl.u32 %v43, 7
    %v45 = vsub.s32 1, %v44
    %v46 = vrot.slane %v37, %v45
    %v49 = vadd.f32 %v35, %v42
    %v50 = vadd.f32 %v36, %v46
    %v51 = vand.u32 2147483647, %v49
    %vm52 = vcmp.le.f32.partialorder %v51, 0.7853982
    %vm53 = vcmp.lt.s32.totalorder %v49, 0
    %v54 = vand.u32 %v49, 2139095040
    %v55 = vshrl.u32 %v54, 23
    %v56 = vsub.s32 %v55, 127
    %v57 = vand.u32 2147483647, %v49
    %v58 = vand.u32 %v57, 8388607
    %v59 = vor.u32 %v58, 8388608
    %v60 = vsub.s32 0, %v59
    %v61 = vadd.s32 %v56, 1
    %vm62 = vcmp.gt.s32.totalorder %v61, 0
    %v63 = vsel %vm62, %v61, 0
    %v64 = vshrl.u32 %v63, 5
    %v65 = vand.u32 %v63, 31
    %v66 = vsub.s32 32, %v65
    %v67 = vshrl.u32 683565275, %v66
    %v68 = vshll.u32 683565275, %v65
    %v69 = vshrl.u32 2475754826, %v66
    %v70 = vor.u32 %v68, %v69
    %v71 = vshll.u32 2475754826, %v65
    %v72 = vshrl.u32 2131351028, %v66
    %v73 = vor.u32 %v71, %v72
    %v74 = vshll.u32 2131351028, %v65
    %v75 = vshrl.u32 2102212464, %v66
    %v76 = vor.u32 %v74, %v75
    %v77 = vshll.u32 2102212464, %v65
    %v78 = vshrl.u32 920167782, %v66
    %v79 = vor.u32 %v77, %v78
    %v80 = vshll.u32 920167782, %v65
    %v81 = vshrl.u32 1326507024, %v66
    %v82 = vor.u32 %v80, %v81
    %vm83 = vcmp.lt.s32.totalorder %v64, 1
    %vm84 = vcmp.lt.s32.totalorder %v64, 2
    %vm85 = vcmp.lt.s32.totalorder %v64, 3
    %vm86 = vcmp.lt.s32.totalorder %v64, 4
    %v87 = vsel %vm83, %v67, %v70
    %v88 = vsel %vm86, %v76, 2102212464
    %v89 = vsel %vm85, %v73, %v88
    %v90 = vsel %vm84, %v87, %v89
    %v91 = vsel %vm83, %v70, %v73
    %v92 = vsel %vm86, %v79, 920167782
    %v93 = vsel %vm85, %v76, %v92
    %v94 = vsel %vm84, %v91, %v93
    %v95 = vsel %vm83, %v73, %v76
    %v96 = vsel %vm86, %v82, 1326507024
    %v97 = vsel %vm85, %v79, %v96
    %v98 = vsel %vm84, %v95, %v97
    %v99 = vshll.u32 %v59, 8
    %v100 = vmul.u32.u64.compose %v99, %v98
    %v101 = vextract.low.u32 %v100
    %v102 = vextract.high.u32 %v100
    %v103 = vmul.u32.u64.compose %v99, %v94
    %v104 = vextract.low.u32 %v103
    %v105 = vextract.high.u32 %v103
    %v106 = vmul.u32 %v99, %v90
    %v107 = vadd.s32 %v102, %v104
    %vm108 = vc.u32 %v102, %v104
    %v109 = vadd.s32 %v105, 1
    %v110 = vsel %vm108, %v109, %v105
    %v111 = vadd.s32 %v106, %v110
    %v112 = vadd.s32 %v111, 536870912
    %v113 = vshrl.u32 %v112, 30
    %v114 = vshll.u32 %v113, 30
    %v115 = vsub.s32 %v111, %v114
    %vm116 = vcmp.lt.s32.totalorder %v115, 0
    %v117 = vsub.s32 0, %v115
    %v118 = vsel %vm116, %v117, %v115
    %v119 = vclz %v118
    %v120 = vsub.s32 %v119, 2
    %vm121 = vcmp.gt.s32.totalorder 0, %v120
    %v122 = vsel %vm121, 0, %v120
    %v123 = vsub.s32 32, %v122
    %v124 = vshll.u32 %v115, %v122
    %v125 = vshrl.u32 %v107, %v123
    %v126 = vor.u32 %v124, %v125
    %v127 = vsub.s32 4294967266, %v122
    %v128 = vadd.s32 %v127, 127
    %v129 = vshll.u32 %v128, 23
    %v130 = vor.u32 4788187, %v129
    %v131 = vand.u32 2147483647, %v130
    %v133 = vcvt.s32.f32 %v126
    %v134 = vmul.f32 %v133, %v131
    %v135 = vxor.u32 %v134, 2147483648
    %v136 = vsel %vm53, %v135, %v134
    %v137 = vsub.s32 4, %v113
    %v138 = vsel %vm53, %v137, %v113
    %v139 = vsel %vm52, %v49, %v136
    %v140 = vsel %vm52, 0, %v138
    %v141 = vcosq.f32.pop %v139
    %v142 = vsinq.f32.pop %v139
    %vm143 = vweird.f32 %v49
    %v144 = vadd.s32 %v140, 3
    %v145 = vand.u32 %v144, 3
    %vm146 = vcmp.lt.s32.totalorder %v145, 2
    %vm147 = vcmp.eq.s32.totalorder %v145, 0
    %v148 = vxor.u32 %v142, 2147483648
    %v149 = vsel %vm147, %v141, %v148
    %vm150 = vcmp.eq.s32.totalorder %v145, 2
    %v151 = vxor.u32 %v141, 2147483648
    %v152 = vsel %vm150, %v151, %v142
    %v153 = vsel %vm146, %v149, %v152
    %v154 = vsel %vm143, nan, %v153
    %v155 = vand.u32 2147483647, %v50
    %vm156 = vcmp.le.f32.partialorder %v155, 0.7853982
    %vm157 = vcmp.lt.s32.totalorder %v50, 0
    %v158 = vand.u32 %v50, 2139095040
    %v159 = vshrl.u32 %v158, 23
    %v160 = vsub.s32 %v159, 127
    %v161 = vand.u32 2147483647, %v50
    %v162 = vand.u32 %v161, 8388607
    %v163 = vor.u32 %v162, 8388608
    %v164 = vsub.s32 0, %v163
    %v165 = vadd.s32 %v160, 1
    %vm166 = vcmp.gt.s32.totalorder %v165, 0
    %v167 = vsel %vm166, %v165, 0
    %v168 = vshrl.u32 %v167, 5
    %v169 = vand.u32 %v167, 31
    %v170 = vsub.s32 32, %v169
    %v171 = vshrl.u32 683565275, %v170
    %v172 = vshll.u32 683565275, %v169
    %v173 = vshrl.u32 2475754826, %v170
    %v174 = vor.u32 %v172, %v173
    %v175 = vshll.u32 2475754826, %v169
    %v176 = vshrl.u32 2131351028, %v170
    %v177 = vor.u32 %v175, %v176
    %v178 = vshll.u32 2131351028, %v169
    %v179 = vshrl.u32 2102212464, %v170
    %v180 = vor.u32 %v178, %v179
    %v181 = vshll.u32 2102212464, %v169
    %v182 = vshrl.u32 920167782, %v170
    %v183 = vor.u32 %v181, %v182
    %v184 = vshll.u32 920167782, %v169
    %v185 = vshrl.u32 1326507024, %v170
    %v186 = vor.u32 %v184, %v185
    %vm187 = vcmp.lt.s32.totalorder %v168, 1
    %vm188 = vcmp.lt.s32.totalorder %v168, 2
    %vm189 = vcmp.lt.s32.totalorder %v168, 3
    %vm190 = vcmp.lt.s32.totalorder %v168, 4
    %v191 = vsel %vm187, %v171, %v174
    %v192 = vsel %vm190, %v180, 2102212464
    %v193 = vsel %vm189, %v177, %v192
    %v194 = vsel %vm188, %v191, %v193
    %v195 = vsel %vm187, %v174, %v177
    %v196 = vsel %vm190, %v183, 920167782
    %v197 = vsel %vm189, %v180, %v196
    %v198 = vsel %vm188, %v195, %v197
    %v199 = vsel %vm187, %v177, %v180
    %v200 = vsel %vm190, %v186, 1326507024
    %v201 = vsel %vm189, %v183, %v200
    %v202 = vsel %vm188, %v199, %v201
    %v203 = vshll.u32 %v163, 8
    %v204 = vmul.u32.u64.compose %v203, %v202
    %v205 = vextract.low.u32 %v204
    %v206 = vextract.high.u32 %v204
    %v207 = vmul.u32.u64.compose %v203, %v198
    %v208 = vextract.low.u32 %v207
    %v209 = vextract.high.u32 %v207
    %v210 = vmul.u32 %v203, %v194
    %v211 = vadd.s32 %v206, %v208
    %vm212 = vc.u32 %v206, %v208
    %v213 = vadd.s32 %v209, 1
    %v214 = vsel %vm212, %v213, %v209
    %v215 = vadd.s32 %v210, %v214
    %v216 = vadd.s32 %v215, 536870912
    %v217 = vshrl.u32 %v216, 30
    %v218 = vshll.u32 %v217, 30
    %v219 = vsub.s32 %v215, %v218
    %vm220 = vcmp.lt.s32.totalorder %v219, 0
    %v221 = vsub.s32 0, %v219
    %v222 = vsel %vm220, %v221, %v219
    %v223 = vclz %v222
    %v224 = vsub.s32 %v223, 2
    %vm225 = vcmp.gt.s32.totalorder 0, %v224
    %v226 = vsel %vm225, 0, %v224
    %v227 = vsub.s32 32, %v226
    %v228 = vshll.u32 %v219, %v226
    %v229 = vshrl.u32 %v211, %v227
    %v230 = vor.u32 %v228, %v229
    %v231 = vsub.s32 4294967266, %v226
    %v232 = vadd.s32 %v231, 127
    %v233 = vshll.u32 %v232, 23
    %v234 = vor.u32 4788187, %v233
    %v235 = vand.u32 2147483647, %v234
    %v237 = vcvt.s32.f32 %v230
    %v238 = vmul.f32 %v237, %v235
    %v239 = vxor.u32 %v238, 2147483648
    %v240 = vsel %vm157, %v239, %v238
    %v241 = vsub.s32 4, %v217
    %v242 = vsel %vm157, %v241, %v217
    %v243 = vsel %vm156, %v50, %v240
    %v244 = vsel %vm156, 0, %v242
    %v245 = vcosq.f32.pop %v243
    %v246 = vsinq.f32.pop %v243
    %vm247 = vweird.f32 %v50
    %v248 = vadd.s32 %v244, 3
    %v249 = vand.u32 %v248, 3
    %vm250 = vcmp.lt.s32.totalorder %v249, 2
    %vm251 = vcmp.eq.s32.totalorder %v249, 0
    %v252 = vxor.u32 %v246, 2147483648
    %v253 = vsel %vm251, %v245, %v252
    %vm254 = vcmp.eq.s32.totalorder %v249, 2
    %v255 = vxor.u32 %v245, 2147483648
    %v256 = vsel %vm254, %v255, %v246
    %v257 = vsel %vm250, %v253, %v256
    %v258 = vsel %vm247, nan, %v257
    %259 = vst [vmem:[#allocation2] sm:$0xff] %v154
    %260 = vst [vmem:[#allocation2 + $0x8] sm:$0xff] %v258
    // Predicated region
    $region14: #{tpu_custom_call.1} parent=1 // pred_check
      _
    $region15: #{tpu_custom_call.1} parent=1 // pred_check_branch
      %262 = sbr.rel (0) target = $region17
    $region16: #{tpu_custom_call.1} parent=1 // pred_region
      %s264 = ssub.s32 256, 256
      %265 = vsyncadd [#allocation3], %s264
      %s267 = sshll.u32 [#allocation2], 4
      %s268 = int_to_ptr.vmem [resolvable:$true] %s267
      %270 = dma.vmem_to_hbm [thread:$0]  %s268, 256, %s3, [#allocation3]
    $region17: #{tpu_custom_call.1} parent=1 // pred_fallthru
      _
    // Predicated region
    $region18: #{tpu_custom_call.1} parent=1 // pred_check
      _
    $region19: #{tpu_custom_call.1} parent=1 // pred_check_branch
      %272 = sbr.rel (0) target = $region21
    $region20: #{tpu_custom_call.1} parent=1 // pred_region
      %273 = dma.done [#allocation3], 256
    $region21: #{tpu_custom_call.1} parent=1 // pred_fallthru
      _
    %274 = vsyncpa [#allocation3], 1

</llo_original>
